<compile_context>
chip_gen: v5e
topology: v5e:2x2
jax: 0.10.0
libtpu: 0.0.40
codegen_flags: <defaults>
</compile_context>

<pallas_src>
import functools

import jax
import jax.numpy as jnp
from jax.experimental import pallas as pl
from jax.experimental.pallas import tpu as pltpu

# MFH hyper-params (OUT_DIM scaled down from 1000 -> 128 for the small test).
MFB_FACTOR_NUM = 5
MFB_OUT_DIM = 128
JOINT_EMB_SIZE = MFB_FACTOR_NUM * MFB_OUT_DIM


def _round_up(x, m):
    return ((x + m - 1) // m) * m


def _signed_sqrt(x):
    # sqrt(relu(x)) - sqrt(relu(-x)) == sign(x) * sqrt(|x|): one sqrt + select.
    r = jnp.sqrt(jnp.abs(x))
    return jnp.where(x < 0.0, -r, r)


def _l2_normalize(x, eps=1e-12):
    # F.normalize(p=2, dim=1): x / max(||x||, eps) == x * rsqrt(max(sumsq, eps^2)).
    ss = jnp.sum(x * x, axis=-1, keepdims=True)
    return x * jax.lax.rsqrt(jnp.maximum(ss, eps * eps))


def mfh_kernel(img_ref, txt_ref, wv_ref, bv_ref, wt_ref, bt_ref,
               wc_ref, bc_ref, out_ref, acc_ref, *, fps, out_pad):
    g = pl.program_id(0)

    @pl.when(g == 0)
    def _init():
        acc_ref[...] = jnp.zeros_like(acc_ref)

    # One fused matmul per modality covering `fps` MFB factors at once.
    # Column layout of the weight tile (per group): factor-major blocks of
    # 2*out_pad columns, first half = 1st-order proj, second half = 2nd-order.
    q = jnp.dot(txt_ref[...], wt_ref[...],
                preferred_element_type=jnp.float32) + bt_ref[g]     # (B, fps*2*OUT)
    i = jnp.dot(img_ref[...], wv_ref[...],
                preferred_element_type=jnp.float32) + bv_ref[g]     # (B, fps*2*OUT)
    e = q * i

    b = acc_ref.shape[0]
    acc2 = jnp.zeros((b, out_pad), jnp.float32)
    acc3 = jnp.zeros((b, out_pad), jnp.float32)
    for f in range(fps):                       # short, lane-aligned VPU reduction
        base = f * 2 * out_pad
        e2f = e[:, base:base + out_pad]                     # 1st-order eltwise
        e3f = e[:, base + out_pad:base + 2 * out_pad] * e2f  # 2nd-order eltwise
        acc2 = acc2 + e2f
        acc3 = acc3 + e3f
    acc_ref[...] += jnp.concatenate([acc2, acc3], axis=-1)   # [o2 | o3]

    @pl.when(g == pl.num_programs(0) - 1)
    def _finalize():
        acc = acc_ref[...]
        o2 = _l2_normalize(_signed_sqrt(acc[:, :out_pad]))
        o3 = _l2_normalize(_signed_sqrt(acc[:, out_pad:]))
        o23 = jnp.concatenate([o2, o3], axis=-1).astype(wc_ref.dtype)
        out_ref[...] = (jnp.dot(o23, wc_ref[...],
                                preferred_element_type=jnp.float32)
                        + bc_ref[...])


def prepare_params(params, *, factors_per_step=None, vmem_weight_budget=8 << 20):
    """One-time packing: permute joint columns by factor, pad OUT/num_answers to
    128-lane multiples, fuse 1st/2nd-order weights along N (factor-major groups),
    fuse the classifier into one (2*OUT_pad, n_pad) matrix, cast weights bf16."""
    OUT, FACT = MFB_OUT_DIM, MFB_FACTOR_NUM
    out_pad = _round_up(OUT, 128)
    num_answers = params["wc"].shape[1]
    n_pad = _round_up(num_answers, 128)
    Dv = params["wv1"].shape[0]
    Dt = params["wt1"].shape[0]

    if factors_per_step is None:
        per_factor_bytes = (Dv + Dt) * 2 * out_pad * 2        # bf16 weight bytes/factor
        factors_per_step = FACT if FACT * per_factor_bytes <= vmem_weight_budget else 1
    assert FACT % factors_per_step == 0
    fps = factors_per_step
    n_groups = FACT // fps

    # PyTorch .view(-1,1,OUT,FACT).sum(3): output d of factor f == joint col d*FACT+f.
    col = jnp.arange(OUT)[None, :] * FACT + jnp.arange(FACT)[:, None]   # (FACT, OUT)
    pad = out_pad - OUT

    def pack_w(w1, w2):
        d_in = w1.shape[0]
        t1 = jnp.transpose(w1[:, col], (1, 0, 2))            # (FACT, D_in, OUT)
        t2 = jnp.transpose(w2[:, col], (1, 0, 2))
        if pad:
            t1 = jnp.pad(t1, ((0, 0), (0, 0), (0, pad)))
            t2 = jnp.pad(t2, ((0, 0), (0, 0), (0, pad)))
        w = jnp.concatenate([t1, t2], axis=-1)                # (FACT, D_in, 2*out_pad)
        w = w.reshape(n_groups, fps, d_in, 2 * out_pad)
        w = jnp.transpose(w, (0, 2, 1, 3)).reshape(n_groups, d_in, fps * 2 * out_pad)
        return w.astype(jnp.bfloat16)

    def pack_b(b1, b2):
        t1 = b1[0][col]                                       # (FACT, OUT)
        t2 = b2[0][col]
        if pad:
            t1 = jnp.pad(t1, ((0, 0), (0, pad)))
            t2 = jnp.pad(t2, ((0, 0), (0, pad)))
        b = jnp.concatenate([t1, t2], axis=-1)                # (FACT, 2*out_pad)
        return b.reshape(n_groups, 1, fps * 2 * out_pad).astype(jnp.float32)

    wc, bc = params["wc"], params["bc"]
    wc_p = jnp.zeros((2 * out_pad, n_pad), jnp.float32)
    wc_p = wc_p.at[:OUT, :num_answers].set(wc[:OUT])
    wc_p = wc_p.at[out_pad:out_pad + OUT, :num_answers].set(wc[OUT:])
    bc_p = jnp.zeros((1, n_pad), jnp.float32).at[:, :num_answers].set(bc)

    return {
        "wv": pack_w(params["wv1"], params["wv2"]),
        "bv": pack_b(params["bv1"], params["bv2"]),
        "wt": pack_w(params["wt1"], params["wt2"]),
        "bt": pack_b(params["bt1"], params["bt2"]),
        "wc": wc_p.astype(jnp.bfloat16),
        "bc": bc_p,
        "num_answers": num_answers,
        "out_pad": out_pad,
        "fps": fps,
    }


def mfh_forward(image_hidden, text_hidden, kp):
    B, Dv = image_hidden.shape
    Dt = text_hidden.shape[1]
    out_pad = kp["out_pad"]
    fps = kp["fps"]
    num_answers = kp["num_answers"]
    n_groups = kp["wv"].shape[0]
    group_cols = fps * 2 * out_pad
    n_pad = kp["bc"].shape[1]

    # bf16 packs 16 sublanes per vreg -> pad batch to a multiple of 16.
    b_pad = max(16, _round_up(B, 16))
    img = jnp.zeros((b_pad, Dv), jnp.bfloat16).at[:B].set(image_hidden.astype(jnp.bfloat16))
    txt = jnp.zeros((b_pad, Dt), jnp.bfloat16).at[:B].set(text_hidden.astype(jnp.bfloat16))

    kernel = functools.partial(mfh_kernel, fps=fps, out_pad=out_pad)

    # Explicit scoped-VMEM budget: double-buffered weight stream + resident blocks
    # (+ headroom), clamped to v7x's 64 MiB physical VMEM.
    streamed = (Dv + Dt) * group_cols * 2                       # bf16, per grid step
    resident = (img.size * 2 + txt.size * 2
                + kp["bv"].size * 4 + kp["bt"].size * 4
                + kp["wc"].size * 2 + kp["bc"].size * 4
                + b_pad * n_pad * 4 + b_pad * 2 * out_pad * 4)
    vmem_limit = int(min(max(4 * streamed + 2 * resident + (2 << 20), 32 << 20), 64 << 20))

    grid_spec = pltpu.PrefetchScalarGridSpec(
        num_scalar_prefetch=0,
        grid=(n_groups,),
        in_specs=[
            pl.BlockSpec((b_pad, Dv), lambda g: (0, 0)),              # image feats (resident)
            pl.BlockSpec((b_pad, Dt), lambda g: (0, 0)),              # text feats (resident)
            pl.BlockSpec((None, Dv, group_cols), lambda g: (g, 0, 0)),  # visual weights, group g
            pl.BlockSpec((n_groups, 1, group_cols), lambda g: (0, 0, 0)),  # visual biases (resident)
            pl.BlockSpec((None, Dt, group_cols), lambda g: (g, 0, 0)),  # text weights, group g
            pl.BlockSpec((n_groups, 1, group_cols), lambda g: (0, 0, 0)),  # text biases (resident)
            pl.BlockSpec((2 * out_pad, n_pad), lambda g: (0, 0)),     # fused classifier weight
            pl.BlockSpec((1, n_pad), lambda g: (0, 0)),               # classifier bias
        ],
        out_specs=pl.BlockSpec((b_pad, n_pad), lambda g: (0, 0)),
        scratch_shapes=[
            pltpu.VMEM((b_pad, 2 * out_pad), jnp.float32),            # [o2 | o3] accumulator
        ],
    )

    out = pl.pallas_call(
        kernel,
        out_shape=jax.ShapeDtypeStruct((b_pad, n_pad), jnp.float32),
        grid_spec=grid_spec,
        compiler_params=pltpu.CompilerParams(
            dimension_semantics=("arbitrary",),
            vmem_limit_bytes=vmem_limit),
    )(img, txt, kp["wv"], kp["bv"], kp["wt"], kp["bt"], kp["wc"], kp["bc"])

    return out[:B, :num_answers]


def mfh_reference(image_hidden, text_hidden, params):
    """Plain-JAX mirror of the PyTorch forward, with the same bf16 quantization
    points as the kernel (weights, activations, classifier inputs)."""
    bf = lambda x: x.astype(jnp.bfloat16).astype(jnp.float32)
    img, txt = bf(image_hidden), bf(text_hidden)

    q2 = txt @ bf(params["wt1"]) + params["bt1"]
    i2 = img @ bf(params["wv1"]) + params["bv1"]
    e2 = q2 * i2
    o2 = e2.reshape(-1, MFB_OUT_DIM, MFB_FACTOR_NUM).sum(-1)
    o2 = _l2_normalize(_signed_sqrt(o2))

    q3 = txt @ bf(params["wt2"]) + params["bt2"]
    i3 = img @ bf(params["wv2"]) + params["bv2"]
    e3 = q3 * i3 * e2
    o3 = e3.reshape(-1, MFB_OUT_DIM, MFB_FACTOR_NUM).sum(-1)
    o3 = _l2_normalize(_signed_sqrt(o3))

    wc = params["wc"]
    return (bf(o2) @ bf(wc[:MFB_OUT_DIM])
            + bf(o3) @ bf(wc[MFB_OUT_DIM:])
            + params["bc"])


def init_params(key, visual_feat_dim, text_feat_dim, num_answers):
    """Raw (PyTorch-equivalent) parameters: weights stored (D_in, D_out)."""
    ks = jax.random.split(key, 10)
    s = 0.02
    return {
        "wv1": s * jax.random.normal(ks[0], (visual_feat_dim, JOINT_EMB_SIZE), jnp.float32),
        "bv1": s * jax.random.normal(ks[1], (1, JOINT_EMB_SIZE), jnp.float32),
        "wt1": s * jax.random.normal(ks[2], (text_feat_dim, JOINT_EMB_SIZE), jnp.float32),
        "bt1": s * jax.random.normal(ks[3], (1, JOINT_EMB_SIZE), jnp.float32),
        "wv2": s * jax.random.normal(ks[4], (visual_feat_dim, JOINT_EMB_SIZE), jnp.float32),
        "bv2": s * jax.random.normal(ks[5], (1, JOINT_EMB_SIZE), jnp.float32),
        "wt2": s * jax.random.normal(ks[6], (text_feat_dim, JOINT_EMB_SIZE), jnp.float32),
        "bt2": s * jax.random.normal(ks[7], (1, JOINT_EMB_SIZE), jnp.float32),
        "wc":  s * jax.random.normal(ks[8], (2 * MFB_OUT_DIM, num_answers), jnp.float32),
        "bc":  s * jax.random.normal(ks[9], (1, num_answers), jnp.float32),
    }


if __name__ == "__main__":
    B, Dv, Dt, num_answers = 2, 32, 32, 16

    key = jax.random.PRNGKey(0)
    k_img, k_txt, k_par = jax.random.split(key, 3)

    # Stand-ins for pooled encoder outputs (CLS / pooler features).
    image_hidden = jax.random.normal(k_img, (B, Dv), jnp.float32)
    text_hidden = jax.random.normal(k_txt, (B, Dt), jnp.float32)

    params = init_params(k_par, Dv, Dt, num_answers)
    kparams = prepare_params(params)          # one-time pack/permute/pad/cast

    logits = mfh_forward(image_hidden, text_hidden, kparams)
    jax.block_until_ready(logits)

    ref = mfh_reference(image_hidden, text_hidden, params)
    assert logits.shape == (B, num_answers)
    assert jnp.allclose(logits, ref, atol=2e-3, rtol=2e-2), "mismatch vs reference"

    print("KERNEL_OK")
</pallas_src>

<mosaic_0001>
module attributes {stable_mosaic.version = 11 : i64} {
  func.func @mfh_kernel(%arg0: i32, %arg1: memref<16x32xbf16, #tpu.memory_space<vmem>>, %arg2: memref<16x32xbf16, #tpu.memory_space<vmem>>, %arg3: memref<1x32x1280xbf16, #tpu.memory_space<vmem>>, %arg4: memref<1x1x1280xf32, #tpu.memory_space<vmem>>, %arg5: memref<1x32x1280xbf16, #tpu.memory_space<vmem>>, %arg6: memref<1x1x1280xf32, #tpu.memory_space<vmem>>, %arg7: memref<256x128xbf16, #tpu.memory_space<vmem>>, %arg8: memref<1x128xf32, #tpu.memory_space<vmem>>, %arg9: memref<16x128xf32, #tpu.memory_space<vmem>>, %arg10: memref<16x256xf32, #tpu.memory_space<vmem>>) attributes {dimension_semantics = [#tpu.dimension_semantics<arbitrary>], iteration_bounds = array<i64: 1>, scalar_prefetch = 0 : i64, scratch_operands = 1 : i64, tpu.core_type = #tpu.core_type<tc>, window_params = [{pipeline_mode = #tpu.pipeline_mode<synchronous>, transform_indices = @transform_0, window_bounds = array<i64: 16, 32>}, {pipeline_mode = #tpu.pipeline_mode<synchronous>, transform_indices = @transform_1, window_bounds = array<i64: 16, 32>}, {transform_indices = @transform_2, window_bounds = array<i64: 1, 32, 1280>}, {pipeline_mode = #tpu.pipeline_mode<synchronous>, transform_indices = @transform_3, window_bounds = array<i64: 1, 1, 1280>}, {transform_indices = @transform_4, window_bounds = array<i64: 1, 32, 1280>}, {pipeline_mode = #tpu.pipeline_mode<synchronous>, transform_indices = @transform_5, window_bounds = array<i64: 1, 1, 1280>}, {pipeline_mode = #tpu.pipeline_mode<synchronous>, transform_indices = @transform_6, window_bounds = array<i64: 256, 128>}, {pipeline_mode = #tpu.pipeline_mode<synchronous>, transform_indices = @transform_7, window_bounds = array<i64: 1, 128>}, {pipeline_mode = #tpu.pipeline_mode<synchronous>, transform_indices = @transform_8, window_bounds = array<i64: 16, 128>}]} {
    %c0_i32 = arith.constant 0 : i32
    %0 = arith.cmpi eq, %arg0, %c0_i32 : i32
    %1 = arith.extui %0 : i1 to i32
    %c0_i32_0 = arith.constant 0 : i32
    %2 = arith.cmpi ne, %1, %c0_i32_0 : i32
    scf.if %2 {
      %cst_23 = arith.constant 0.000000e+00 : f32
      %56 = vector.broadcast %cst_23 : f32 to vector<16x256xf32>
      %c0_24 = arith.constant 0 : index
      %c0_25 = arith.constant 0 : index
      %57 = vector.load %arg10[%c0_24, %c0_25] : memref<16x256xf32, #tpu.memory_space<vmem>>, vector<16x256xf32>
      tpu.vector_store %arg10[%c0_24, %c0_25], %56 {strides = array<i32>} : memref<16x256xf32, #tpu.memory_space<vmem>>, vector<16x256xf32>,
    } else {
    }
    %c0 = arith.constant 0 : index
    %c0_1 = arith.constant 0 : index
    %3 = vector.load %arg2[%c0, %c0_1] : memref<16x32xbf16, #tpu.memory_space<vmem>>, vector<16x32xbf16>
    %c0_2 = arith.constant 0 : index
    %c0_3 = arith.constant 0 : index
    %c0_4 = arith.constant 0 : index
    %4 = vector.load %arg5[%c0_2, %c0_3, %c0_4] : memref<1x32x1280xbf16, #tpu.memory_space<vmem>>, vector<1x32x1280xbf16>
    %5 = vector.shape_cast %4 : vector<1x32x1280xbf16> to vector<32x1280xbf16>
    %cst = arith.constant dense<0.000000e+00> : vector<16x1280xf32>
    %6 = tpu.matmul %3, %5, %cst {dimension_numbers = #tpu.dot_dimension_numbers<[1], [0], [0], [1], [0, 0, 1, 1], [], []>} : vector<16x32xbf16>, vector<32x1280xbf16>, vector<16x1280xf32> -> vector<16x1280xf32>
    %7 = arith.index_cast %arg0 : i32 to index
    %c0_5 = arith.constant 0 : index
    %c0_6 = arith.constant 0 : index
    %8 = vector.load %arg6[%7, %c0_5, %c0_6] : memref<1x1x1280xf32, #tpu.memory_space<vmem>>, vector<1x1x1280xf32>
    %9 = vector.shape_cast %8 : vector<1x1x1280xf32> to vector<1x1280xf32>
    %10 = vector.broadcast %9 : vector<1x1280xf32> to vector<16x1280xf32>
    %11 = arith.addf %6, %10 : vector<16x1280xf32>
    %c0_7 = arith.constant 0 : index
    %c0_8 = arith.constant 0 : index
    %12 = vector.load %arg1[%c0_7, %c0_8] : memref<16x32xbf16, #tpu.memory_space<vmem>>, vector<16x32xbf16>
    %c0_9 = arith.constant 0 : index
    %c0_10 = arith.constant 0 : index
    %c0_11 = arith.constant 0 : index
    %13 = vector.load %arg3[%c0_9, %c0_10, %c0_11] : memref<1x32x1280xbf16, #tpu.memory_space<vmem>>, vector<1x32x1280xbf16>
    %14 = vector.shape_cast %13 : vector<1x32x1280xbf16> to vector<32x1280xbf16>
    %cst_12 = arith.constant dense<0.000000e+00> : vector<16x1280xf32>
    %15 = tpu.matmul %12, %14, %cst_12 {dimension_numbers = #tpu.dot_dimension_numbers<[1], [0], [0], [1], [0, 0, 1, 1], [], []>} : vector<16x32xbf16>, vector<32x1280xbf16>, vector<16x1280xf32> -> vector<16x1280xf32>
    %16 = arith.index_cast %arg0 : i32 to index
    %c0_13 = arith.constant 0 : index
    %c0_14 = arith.constant 0 : index
    %17 = vector.load %arg4[%16, %c0_13, %c0_14] : memref<1x1x1280xf32, #tpu.memory_space<vmem>>, vector<1x1x1280xf32>
    %18 = vector.shape_cast %17 : vector<1x1x1280xf32> to vector<1x1280xf32>
    %19 = vector.broadcast %18 : vector<1x1280xf32> to vector<16x1280xf32>
    %20 = arith.addf %15, %19 : vector<16x1280xf32>
    %21 = arith.mulf %11, %20 : vector<16x1280xf32>
    %cst_15 = arith.constant 0.000000e+00 : f32
    %22 = vector.broadcast %cst_15 : f32 to vector<16x128xf32>
    %cst_16 = arith.constant 0.000000e+00 : f32
    %23 = vector.broadcast %cst_16 : f32 to vector<16x128xf32>
    %24 = vector.extract_strided_slice %21 {offsets = [0, 0], sizes = [16, 128], strides = [1, 1]} : vector<16x1280xf32> to vector<16x128xf32>
    %25 = vector.extract_strided_slice %21 {offsets = [0, 128], sizes = [16, 128], strides = [1, 1]} : vector<16x1280xf32> to vector<16x128xf32>
    %26 = arith.mulf %25, %24 : vector<16x128xf32>
    %27 = arith.addf %22, %24 : vector<16x128xf32>
    %28 = arith.addf %23, %26 : vector<16x128xf32>
    %29 = vector.extract_strided_slice %21 {offsets = [0, 256], sizes = [16, 128], strides = [1, 1]} : vector<16x1280xf32> to vector<16x128xf32>
    %30 = vector.extract_strided_slice %21 {offsets = [0, 384], sizes = [16, 128], strides = [1, 1]} : vector<16x1280xf32> to vector<16x128xf32>
    %31 = arith.mulf %30, %29 : vector<16x128xf32>
    %32 = arith.addf %27, %29 : vector<16x128xf32>
    %33 = arith.addf %28, %31 : vector<16x128xf32>
    %34 = vector.extract_strided_slice %21 {offsets = [0, 512], sizes = [16, 128], strides = [1, 1]} : vector<16x1280xf32> to vector<16x128xf32>
    %35 = vector.extract_strided_slice %21 {offsets = [0, 640], sizes = [16, 128], strides = [1, 1]} : vector<16x1280xf32> to vector<16x128xf32>
    %36 = arith.mulf %35, %34 : vector<16x128xf32>
    %37 = arith.addf %32, %34 : vector<16x128xf32>
    %38 = arith.addf %33, %36 : vector<16x128xf32>
    %39 = vector.extract_strided_slice %21 {offsets = [0, 768], sizes = [16, 128], strides = [1, 1]} : vector<16x1280xf32> to vector<16x128xf32>
    %40 = vector.extract_strided_slice %21 {offsets = [0, 896], sizes = [16, 128], strides = [1, 1]} : vector<16x1280xf32> to vector<16x128xf32>
    %41 = arith.mulf %40, %39 : vector<16x128xf32>
    %42 = arith.addf %37, %39 : vector<16x128xf32>
    %43 = arith.addf %38, %41 : vector<16x128xf32>
    %44 = vector.extract_strided_slice %21 {offsets = [0, 1024], sizes = [16, 128], strides = [1, 1]} : vector<16x1280xf32> to vector<16x128xf32>
    %45 = vector.extract_strided_slice %21 {offsets = [0, 1152], sizes = [16, 128], strides = [1, 1]} : vector<16x1280xf32> to vector<16x128xf32>
    %46 = arith.mulf %45, %44 : vector<16x128xf32>
    %47 = arith.addf %42, %44 : vector<16x128xf32>
    %48 = arith.addf %43, %46 : vector<16x128xf32>
    %c0_17 = arith.constant 0 : index
    %c0_18 = arith.constant 0 : index
    %49 = vector.load %arg10[%c0_17, %c0_18] : memref<16x256xf32, #tpu.memory_space<vmem>>, vector<16x256xf32>
    %50 = tpu.concatenate %47, %48 in 1 : vector<16x128xf32>, vector<16x128xf32> -> vector<16x256xf32>
    %51 = arith.addf %49, %50 : vector<16x256xf32>
    %c0_19 = arith.constant 0 : index
    %c0_20 = arith.constant 0 : index
    %52 = vector.load %arg10[%c0_19, %c0_20] : memref<16x256xf32, #tpu.memory_space<vmem>>, vector<16x256xf32>
    tpu.vector_store %arg10[%c0_19, %c0_20], %51 {strides = array<i32>} : memref<16x256xf32, #tpu.memory_space<vmem>>, vector<16x256xf32>,
    %c0_i32_21 = arith.constant 0 : i32
    %53 = arith.cmpi eq, %arg0, %c0_i32_21 : i32
    %54 = arith.extui %53 : i1 to i32
    %c0_i32_22 = arith.constant 0 : i32
    %55 = arith.cmpi ne, %54, %c0_i32_22 : i32
    scf.if %55 {
      %c0_23 = arith.constant 0 : index
      %c0_24 = arith.constant 0 : index
      %56 = vector.load %arg10[%c0_23, %c0_24] : memref<16x256xf32, #tpu.memory_space<vmem>>, vector<16x256xf32>
      %57 = vector.extract_strided_slice %56 {offsets = [0, 0], sizes = [16, 128], strides = [1, 1]} : vector<16x256xf32> to vector<16x128xf32>
      %58 = math.absf %57 : vector<16x128xf32>
      %59 = math.sqrt %58 : vector<16x128xf32>
      %cst_25 = arith.constant 0.000000e+00 : f32
      %60 = vector.broadcast %cst_25 : f32 to vector<16x128xf32>
      %61 = arith.cmpf olt, %57, %60 : vector<16x128xf32>
      %cst_26 = arith.constant 0.000000e+00 : f32
      %62 = vector.broadcast %cst_26 : f32 to vector<16x128xf32>
      %63 = arith.subf %62, %59 : vector<16x128xf32>
      %64 = arith.select %61, %63, %59 : vector<16x128xi1>, vector<16x128xf32>
      %65 = arith.mulf %64, %64 : vector<16x128xf32>
      %cst_27 = arith.constant dense<0.000000e+00> : vector<16xf32>
      %66 = vector.multi_reduction <add>, %65, %cst_27 [1] : vector<16x128xf32> to vector<16xf32>
      %67 = vector.shape_cast %66 : vector<16xf32> to vector<16x1xf32>
      %cst_28 = arith.constant 1.000000e-24 : f32
      %68 = vector.broadcast %cst_28 : f32 to vector<16x1xf32>
      %69 = arith.maximumf %67, %68 : vector<16x1xf32>
      %70 = math.rsqrt %69 : vector<16x1xf32>
      %71 = vector.broadcast %70 : vector<16x1xf32> to vector<16x128xf32>
      %72 = arith.mulf %64, %71 : vector<16x128xf32>
      %73 = vector.extract_strided_slice %56 {offsets = [0, 128], sizes = [16, 128], strides = [1, 1]} : vector<16x256xf32> to vector<16x128xf32>
      %74 = math.absf %73 : vector<16x128xf32>
      %75 = math.sqrt %74 : vector<16x128xf32>
      %cst_29 = arith.constant 0.000000e+00 : f32
      %76 = vector.broadcast %cst_29 : f32 to vector<16x128xf32>
      %77 = arith.cmpf olt, %73, %76 : vector<16x128xf32>
      %cst_30 = arith.constant 0.000000e+00 : f32
      %78 = vector.broadcast %cst_30 : f32 to vector<16x128xf32>
      %79 = arith.subf %78, %75 : vector<16x128xf32>
      %80 = arith.select %77, %79, %75 : vector<16x128xi1>, vector<16x128xf32>
      %81 = arith.mulf %80, %80 : vector<16x128xf32>
      %cst_31 = arith.constant dense<0.000000e+00> : vector<16xf32>
      %82 = vector.multi_reduction <add>, %81, %cst_31 [1] : vector<16x128xf32> to vector<16xf32>
      %83 = vector.shape_cast %82 : vector<16xf32> to vector<16x1xf32>
      %cst_32 = arith.constant 1.000000e-24 : f32
      %84 = vector.broadcast %cst_32 : f32 to vector<16x1xf32>
      %85 = arith.maximumf %83, %84 : vector<16x1xf32>
      %86 = math.rsqrt %85 : vector<16x1xf32>
      %87 = vector.broadcast %86 : vector<16x1xf32> to vector<16x128xf32>
      %88 = arith.mulf %80, %87 : vector<16x128xf32>
      %89 = tpu.concatenate %72, %88 in 1 : vector<16x128xf32>, vector<16x128xf32> -> vector<16x256xf32>
      %90 = arith.truncf %89 : vector<16x256xf32> to vector<16x256xbf16>
      %c0_33 = arith.constant 0 : index
      %c0_34 = arith.constant 0 : index
      %91 = vector.load %arg7[%c0_33, %c0_34] : memref<256x128xbf16, #tpu.memory_space<vmem>>, vector<256x128xbf16>
      %cst_35 = arith.constant dense<0.000000e+00> : vector<16x128xf32>
      %92 = tpu.matmul %90, %91, %cst_35 {dimension_numbers = #tpu.dot_dimension_numbers<[1], [0], [0], [1], [0, 0, 1, 1], [], []>} : vector<16x256xbf16>, vector<256x128xbf16>, vector<16x128xf32> -> vector<16x128xf32>
      %c0_36 = arith.constant 0 : index
      %c0_37 = arith.constant 0 : index
      %93 = vector.load %arg8[%c0_36, %c0_37] : memref<1x128xf32, #tpu.memory_space<vmem>>, vector<1x128xf32>
      %94 = vector.broadcast %93 : vector<1x128xf32> to vector<16x128xf32>
      %95 = arith.addf %92, %94 : vector<16x128xf32>
      %c0_38 = arith.constant 0 : index
      %c0_39 = arith.constant 0 : index
      %96 = vector.load %arg9[%c0_38, %c0_39] : memref<16x128xf32, #tpu.memory_space<vmem>>, vector<16x128xf32>
      tpu.vector_store %arg9[%c0_38, %c0_39], %95 {strides = array<i32>} : memref<16x128xf32, #tpu.memory_space<vmem>>, vector<16x128xf32>,
    } else {
    }
    return
  }
  func.func @transform_0(%arg0: i32) -> (i32, i32) {
    %c0_i32 = arith.constant 0 : i32
    %c0_i32_0 = arith.constant 0 : i32
    %c0_i32_1 = arith.constant 0 : i32
    return %c0_i32, %c0_i32_0 : i32, i32
  }
  func.func @transform_1(%arg0: i32) -> (i32, i32) {
    %c0_i32 = arith.constant 0 : i32
    %c0_i32_0 = arith.constant 0 : i32
    %c0_i32_1 = arith.constant 0 : i32
    return %c0_i32, %c0_i32_0 : i32, i32
  }
  func.func @transform_2(%arg0: i32) -> (i32, i32, i32) {
    %c0_i32 = arith.constant 0 : i32
    %c0_i32_0 = arith.constant 0 : i32
    %c0_i32_1 = arith.constant 0 : i32
    return %arg0, %c0_i32, %c0_i32_0 : i32, i32, i32
  }
  func.func @transform_3(%arg0: i32) -> (i32, i32, i32) {
    %c0_i32 = arith.constant 0 : i32
    %c0_i32_0 = arith.constant 0 : i32
    %c0_i32_1 = arith.constant 0 : i32
    %c0_i32_2 = arith.constant 0 : i32
    return %c0_i32, %c0_i32_0, %c0_i32_1 : i32, i32, i32
  }
  func.func @transform_4(%arg0: i32) -> (i32, i32, i32) {
    %c0_i32 = arith.constant 0 : i32
    %c0_i32_0 = arith.constant 0 : i32
    %c0_i32_1 = arith.constant 0 : i32
    return %arg0, %c0_i32, %c0_i32_0 : i32, i32, i32
  }
  func.func @transform_5(%arg0: i32) -> (i32, i32, i32) {
    %c0_i32 = arith.constant 0 : i32
    %c0_i32_0 = arith.constant 0 : i32
    %c0_i32_1 = arith.constant 0 : i32
    %c0_i32_2 = arith.constant 0 : i32
    return %c0_i32, %c0_i32_0, %c0_i32_1 : i32, i32, i32
  }
  func.func @transform_6(%arg0: i32) -> (i32, i32) {
    %c0_i32 = arith.constant 0 : i32
    %c0_i32_0 = arith.constant 0 : i32
    %c0_i32_1 = arith.constant 0 : i32
    return %c0_i32, %c0_i32_0 : i32, i32
  }
  func.func @transform_7(%arg0: i32) -> (i32, i32) {
    %c0_i32 = arith.constant 0 : i32
    %c0_i32_0 = arith.constant 0 : i32
    %c0_i32_1 = arith.constant 0 : i32
    return %c0_i32, %c0_i32_0 : i32, i32
  }
  func.func @transform_8(%arg0: i32) -> (i32, i32) {
    %c0_i32 = arith.constant 0 : i32
    %c0_i32_0 = arith.constant 0 : i32
    %c0_i32_1 = arith.constant 0 : i32
    return %c0_i32, %c0_i32_0 : i32, i32
  }
}

</mosaic_0001>

<llo_original>
// kernel: tpu_custom_call.1
$region0: #{tpu_custom_call.1}
  #allocation0 [shape = 'u32[]', space=smem, size = 0x4, offset = 0x4, fixed_abs, tag = 'smem constant byte address 0x4 - core index']
  #allocation1 [shape = 'u32[72,128]{1,0:T(1,128)}', space=vmem, size = 0x9000, scoped, tag = 'internal scratch']
  #allocation2 [shape = 'f32[16,256]{1,0:T(8,128)}', space=vmem, size = 0x4000, scoped, tag = 'scratch operand']
  %s0 = inlined_call_operand.hbm [shape: bf16[16,32], index: 0, kind: input, shape index: {}]
  %s1 = inlined_call_operand.hbm [shape: bf16[16,32], index: 1, kind: input, shape index: {}]
  %s2 = inlined_call_operand.hbm [shape: bf16[1,32,1280], index: 2, kind: input, shape index: {}]
  %s3 = inlined_call_operand.hbm [shape: f32[1,1,1280], index: 3, kind: input, shape index: {}]
  %s4 = inlined_call_operand.hbm [shape: bf16[1,32,1280], index: 4, kind: input, shape index: {}]
  %s5 = inlined_call_operand.hbm [shape: f32[1,1,1280], index: 5, kind: input, shape index: {}]
  %s6 = inlined_call_operand.hbm [shape: bf16[256,128], index: 6, kind: input, shape index: {}]
  %s7 = inlined_call_operand.vmem [shape: f32[1,128], index: 7, kind: input, shape index: {}]
  %s8 = inlined_call_operand.hbm [shape: f32[16,128], index: 8, kind: output, shape index: {}]
  %s9 = sld [smem:[#allocation0]]
  $region78: #{tpu_custom_call.1} parent=0
    _
  %s11 = ssub.s32 1, %s9
  %s12 = scalar_select 0, %s11, %s9
  $region1: #{tpu_custom_call.1} parent=0
    #allocation3 [shape = 'u8[4096]{0}', space=vmem, size = 0x1000, scoped, tag = 'input window, operand 0, single buffered']
    #allocation4 [shape = 's32[1]{0}', space=sflag, size = 0x4, scoped, tag = 'scoped memory for tpu_custom_call.1']
    #allocation5 [shape = 's32[1]{0}', space=sflag, size = 0x4, scoped, tag = 'scoped memory for tpu_custom_call.1']
    #allocation6 [shape = 'u8[4096]{0}', space=vmem, size = 0x1000, scoped, tag = 'input window, operand 1, single buffered']
    #allocation7 [shape = 's32[1]{0}', space=sflag, size = 0x4, scoped, tag = 'scoped memory for tpu_custom_call.1']
    #allocation8 [shape = 'u8[81920]{0}', space=vmem, size = 0x14000, scoped, tag = 'input window, operand 2, single buffered']
    #allocation9 [shape = 'u8[5120]{0}', space=vmem, size = 0x1400, scoped, tag = 'input window, operand 3, single buffered']
    #allocation10 [shape = 's32[1]{0}', space=sflag, size = 0x4, scoped, tag = 'scoped memory for tpu_custom_call.1']
    #allocation11 [shape = 'u8[81920]{0}', space=vmem, size = 0x14000, scoped, tag = 'input window, operand 4, single buffered']
    #allocation12 [shape = 'u8[5120]{0}', space=vmem, size = 0x1400, scoped, tag = 'input window, operand 5, single buffered']
    #allocation13 [shape = 's32[1]{0}', space=sflag, size = 0x4, scoped, tag = 'scoped memory for tpu_custom_call.1']
    #allocation14 [shape = 'u8[65536]{0}', space=vmem, size = 0x10000, scoped, tag = 'input window, operand 6, single buffered']
    #allocation15 [shape = 'u8[8192]{0}', space=vmem, size = 0x2000, scoped, tag = 'output window, operand 0, single buffered']
    %13 = vsyncpa [#allocation4], 0
    %14 = vsyncpa [#allocation7], 0
    %15 = vsyncpa [#allocation10], 0
    %16 = vsyncpa [#allocation13], 0
    %17 = vsyncpa [#allocation5], 0
    // Predicated region
    $region2: #{tpu_custom_call.1} parent=1 // pred_check
      _
    $region3: #{tpu_custom_call.1} parent=1 // pred_check_branch
      %19 = sbr.rel (0) target = $region5
    $region4: #{tpu_custom_call.1} parent=1 // pred_region
      %21 = vsyncadd [#allocation4], 0
      %s22 = sshll.u32 %s0, 4
      %s23 = int_to_ptr.hbm [resolvable:$true] %s22
      %s24 = sshll.u32 [#allocation3], 4
      %s25 = int_to_ptr.vmem [resolvable:$true] %s24
      %30 = dma.hbm_to_vmem [thread:$0]  %s23, 128, %s25, [#allocation4], 64, 64, 4
    $region5: #{tpu_custom_call.1} parent=1 // pred_fallthru
      _
    // Predicated region
    $region6: #{tpu_custom_call.1} parent=1 // pred_check
      _
    $region7: #{tpu_custom_call.1} parent=1 // pred_check_branch
      %32 = sbr.rel (0) target = $region9
    $region8: #{tpu_custom_call.1} parent=1 // pred_region
      %34 = vsyncadd [#allocation7], 0
      %s35 = sshll.u32 %s1, 4
      %s36 = int_to_ptr.hbm [resolvable:$true] %s35
      %s37 = sshll.u32 [#allocation6], 4
      %s38 = int_to_ptr.vmem [resolvable:$true] %s37
      %43 = dma.hbm_to_vmem [thread:$0]  %s36, 128, %s38, [#allocation7], 64, 64, 4
    $region9: #{tpu_custom_call.1} parent=1 // pred_fallthru
      _
    // Predicated region
    $region10: #{tpu_custom_call.1} parent=1 // pred_check
      _
    $region11: #{tpu_custom_call.1} parent=1 // pred_check_branch
      %45 = sbr.rel (0) target = $region13
    $region12: #{tpu_custom_call.1} parent=1 // pred_region
      %47 = vsyncadd [#allocation7], 0
      %s48 = sshll.u32 %s2, 4
      %s49 = int_to_ptr.hbm [resolvable:$true] %s48
      %s50 = sshll.u32 [#allocation8], 4
      %s51 = int_to_ptr.vmem [resolvable:$true] %s50
      %56 = dma.hbm_to_vmem [thread:$0]  %s49, 2560, %s51, [#allocation7], 640, 640, 40
    $region13: #{tpu_custom_call.1} parent=1 // pred_fallthru
      _
    // Predicated region
    $region14: #{tpu_custom_call.1} parent=1 // pred_check
      _
    $region15: #{tpu_custom_call.1} parent=1 // pred_check_branch
      %58 = sbr.rel (0) target = $region17
    $region16: #{tpu_custom_call.1} parent=1 // pred_region
      %60 = vsyncadd [#allocation10], 0
      %s62 = sshll.u32 %s3, 4
      %s63 = int_to_ptr.hbm [resolvable:$true] %s62
      %s64 = sshll.u32 [#allocation9], 4
      %s65 = int_to_ptr.vmem [resolvable:$true] %s64
      %67 = dma.hbm_to_vmem [thread:$0]  %s63, 160, %s65, [#allocation10]
    $region17: #{tpu_custom_call.1} parent=1 // pred_fallthru
      _
    // Predicated region
    $region18: #{tpu_custom_call.1} parent=1 // pred_check
      _
    $region19: #{tpu_custom_call.1} parent=1 // pred_check_branch
      %69 = sbr.rel (0) target = $region21
    $region20: #{tpu_custom_call.1} parent=1 // pred_region
      %71 = vsyncadd [#allocation10], 0
      %s72 = sshll.u32 %s4, 4
      %s73 = int_to_ptr.hbm [resolvable:$true] %s72
      %s74 = sshll.u32 [#allocation11], 4
      %s75 = int_to_ptr.vmem [resolvable:$true] %s74
      %80 = dma.hbm_to_vmem [thread:$0]  %s73, 2560, %s75, [#allocation10], 640, 640, 40
    $region21: #{tpu_custom_call.1} parent=1 // pred_fallthru
      _
    // Predicated region
    $region22: #{tpu_custom_call.1} parent=1 // pred_check
      _
    $region23: #{tpu_custom_call.1} parent=1 // pred_check_branch
      %82 = sbr.rel (0) target = $region25
    $region24: #{tpu_custom_call.1} parent=1 // pred_region
      %84 = vsyncadd [#allocation13], 0
      %s86 = sshll.u32 %s5, 4
      %s87 = int_to_ptr.hbm [resolvable:$true] %s86
      %s88 = sshll.u32 [#allocation12], 4
      %s89 = int_to_ptr.vmem [resolvable:$true] %s88
      %91 = dma.hbm_to_vmem [thread:$0]  %s87, 160, %s89, [#allocation13]
    $region25: #{tpu_custom_call.1} parent=1 // pred_fallthru
      _
    // Predicated region
    $region26: #{tpu_custom_call.1} parent=1 // pred_check
      _
    $region27: #{tpu_custom_call.1} parent=1 // pred_check_branch
      %93 = sbr.rel (0) target = $region29
    $region28: #{tpu_custom_call.1} parent=1 // pred_region
      %95 = vsyncadd [#allocation13], 0
      %s96 = sshll.u32 %s6, 4
      %s97 = int_to_ptr.hbm [resolvable:$true] %s96
      %s98 = sshll.u32 [#allocation14], 4
      %s99 = int_to_ptr.vmem [resolvable:$true] %s98
      %104 = dma.hbm_to_vmem [thread:$0]  %s97, 2048, %s99, [#allocation13], 64, 64, 4
    $region29: #{tpu_custom_call.1} parent=1 // pred_fallthru
      _
    // Predicated region
    $region30: #{tpu_custom_call.1} parent=1 // pred_check
      _
    $region31: #{tpu_custom_call.1} parent=1 // pred_check_branch
      %106 = sbr.rel (0) target = $region33
    $region32: #{tpu_custom_call.1} parent=1 // pred_region
      _
    $region33: #{tpu_custom_call.1} parent=1 // pred_fallthru
      _
    // Predicated region
    $region34: #{tpu_custom_call.1} parent=1 // pred_check
      _
    $region35: #{tpu_custom_call.1} parent=1 // pred_check_branch
      %108 = sbr.rel (0) target = $region37
    $region36: #{tpu_custom_call.1} parent=1 // pred_region
      %110 = dma.done [#allocation4], 128
    $region37: #{tpu_custom_call.1} parent=1 // pred_fallthru
      _
    // Predicated region
    $region38: #{tpu_custom_call.1} parent=1 // pred_check
      _
    $region39: #{tpu_custom_call.1} parent=1 // pred_check_branch
      %112 = sbr.rel (0) target = $region41
    $region40: #{tpu_custom_call.1} parent=1 // pred_region
      %114 = dma.done [#allocation7], 128
    $region41: #{tpu_custom_call.1} parent=1 // pred_fallthru
      _
    // Predicated region
    $region42: #{tpu_custom_call.1} parent=1 // pred_check
      _
    $region43: #{tpu_custom_call.1} parent=1 // pred_check_branch
      %116 = sbr.rel (0) target = $region45
    $region44: #{tpu_custom_call.1} parent=1 // pred_region
      %118 = dma.done [#allocation7], 2560
    $region45: #{tpu_custom_call.1} parent=1 // pred_fallthru
      _
    // Predicated region
    $region46: #{tpu_custom_call.1} parent=1 // pred_check
      _
    $region47: #{tpu_custom_call.1} parent=1 // pred_check_branch
      %120 = sbr.rel (0) target = $region49
    $region48: #{tpu_custom_call.1} parent=1 // pred_region
      %122 = dma.done [#allocation10], 160
    $region49: #{tpu_custom_call.1} parent=1 // pred_fallthru
      _
    // Predicated region
    $region50: #{tpu_custom_call.1} parent=1 // pred_check
      _
    $region51: #{tpu_custom_call.1} parent=1 // pred_check_branch
      %124 = sbr.rel (0) target = $region53
    $region52: #{tpu_custom_call.1} parent=1 // pred_region
      %126 = dma.done [#allocation10], 2560
    $region53: #{tpu_custom_call.1} parent=1 // pred_fallthru
      _
    // Predicated region
    $region54: #{tpu_custom_call.1} parent=1 // pred_check
      _
    $region55: #{tpu_custom_call.1} parent=1 // pred_check_branch
      %128 = sbr.rel (0) target = $region57
    $region56: #{tpu_custom_call.1} parent=1 // pred_region
      %130 = dma.done [#allocation13], 160
    $region57: #{tpu_custom_call.1} parent=1 // pred_fallthru
      _
    // Predicated region
    $region58: #{tpu_custom_call.1} parent=1 // pred_check
      _
    $region59: #{tpu_custom_call.1} parent=1 // pred_check_branch
      %132 = sbr.rel (0) target = $region61
    $region60: #{tpu_custom_call.1} parent=1 // pred_region
      %134 = dma.done [#allocation13], 2048
    $region61: #{tpu_custom_call.1} parent=1 // pred_fallthru
      _
    %p136 = scmp.eq.s32.totalorder 0, 0
    // Predicated region
    $region62: #{tpu_custom_call.1} parent=1 // pred_check
      %p137 = pneg %p136
    $region63: #{tpu_custom_call.1} parent=1 // pred_check_branch
      %139 = sbr.rel (%p137) target = $region65
    $region64: #{tpu_custom_call.1} parent=1 // pred_region
      %140 = vst [vmem:[#allocation2] sm:$0xff] 0.0
      %141 = vst [vmem:[#allocation2 + $0x8] sm:$0xff] 0.0
      %142 = vst [vmem:[#allocation2 + $0x10] sm:$0xff] 0.0
      %143 = vst [vmem:[#allocation2 + $0x18] sm:$0xff] 0.0
    $region65: #{tpu_custom_call.1} parent=1 // pred_fallthru
      _
    %v144 = vld [vmem:[#allocation6] sm:$0xf]
    %v145 = vld [vmem:[#allocation6 + $0x4] sm:$0xf]
    %v146 = vld [vmem:[#allocation11] sm:$0xff]
    %v147 = vld [vmem:[#allocation11 + $0x8] sm:$0xff]
    %v148 = vld [vmem:[#allocation11 + $0x10] sm:$0xff]
    %v149 = vld [vmem:[#allocation11 + $0x18] sm:$0xff]
    %v150 = vld [vmem:[#allocation11 + $0x20] sm:$0xff]
    %v151 = vld [vmem:[#allocation11 + $0x28] sm:$0xff]
    %v152 = vld [vmem:[#allocation11 + $0x30] sm:$0xff]
    %v153 = vld [vmem:[#allocation11 + $0x38] sm:$0xff]
    %v154 = vld [vmem:[#allocation11 + $0x40] sm:$0xff]
    %v155 = vld [vmem:[#allocation11 + $0x48] sm:$0xff]
    %v156 = vld [vmem:[#allocation11 + $0x50] sm:$0xff]
    %v157 = vld [vmem:[#allocation11 + $0x58] sm:$0xff]
    %v158 = vld [vmem:[#allocation11 + $0x60] sm:$0xff]
    %v159 = vld [vmem:[#allocation11 + $0x68] sm:$0xff]
    %v160 = vld [vmem:[#allocation11 + $0x70] sm:$0xff]
    %v161 = vld [vmem:[#allocation11 + $0x78] sm:$0xff]
    %v162 = vld [vmem:[#allocation11 + $0x80] sm:$0xff]
    %v163 = vld [vmem:[#allocation11 + $0x88] sm:$0xff]
    %v164 = vld [vmem:[#allocation11 + $0x90] sm:$0xff]
    %v165 = vld [vmem:[#allocation11 + $0x98] sm:$0xff]
    %s166 = smul.u32 0, 10
    %s167 = scalar_lea.vmem [#allocation12], %s166
    %v168 = vld [vmem:[%s167] sm:$0xff]
    %v169 = vld [vmem:[%s167 + $0x8] sm:$0x3]
    %v172 = vperm.slane %v168, 0
    %v173 = vperm.slane %v168, 1
    %v174 = vperm.slane %v168, 2
    %v175 = vperm.slane %v168, 3
    %v176 = vperm.slane %v168, 4
    %v177 = vperm.slane %v168, 5
    %v178 = vperm.slane %v168, 6
    %v179 = vperm.slane %v168, 7
    %v180 = vperm.slane %v169, 0
    %v181 = vperm.slane %v169, 1
    %v194 = vunpack.c.l.b16 %v144
    %v195 = vunpack.c.l.b16 %v145
    %v196 = vpack.c.b16 %v195, %v194
    %v217 = vunpack.c.l.b16 %v146
    %v218 = vunpack.c.h.b16 %v146
    %v219 = vunpack.c.l.b16 %v147
    %v220 = vunpack.c.h.b16 %v147
    %v221 = vunpack.c.l.b16 %v148
    %v222 = vunpack.c.h.b16 %v148
    %v223 = vunpack.c.l.b16 %v149
    %v224 = vunpack.c.h.b16 %v149
    %v225 = vunpack.c.l.b16 %v150
    %v226 = vunpack.c.h.b16 %v150
    %v227 = vunpack.c.l.b16 %v151
    %v228 = vunpack.c.h.b16 %v151
    %v229 = vunpack.c.l.b16 %v152
    %v230 = vunpack.c.h.b16 %v152
    %v231 = vunpack.c.l.b16 %v153
    %v232 = vunpack.c.h.b16 %v153
    %v233 = vunpack.c.l.b16 %v154
    %v234 = vunpack.c.h.b16 %v154
    %v235 = vunpack.c.l.b16 %v155
    %v236 = vunpack.c.h.b16 %v155
    %v237 = vunpack.c.l.b16 %v156
    %v238 = vunpack.c.h.b16 %v156
    %v239 = vunpack.c.l.b16 %v157
    %v240 = vunpack.c.h.b16 %v157
    %v241 = vunpack.c.l.b16 %v158
    %v242 = vunpack.c.h.b16 %v158
    %v243 = vunpack.c.l.b16 %v159
    %v244 = vunpack.c.h.b16 %v159
    %v245 = vunpack.c.l.b16 %v160
    %v246 = vunpack.c.h.b16 %v160
    %v247 = vunpack.c.l.b16 %v161
    %v248 = vunpack.c.h.b16 %v161
    %v249 = vunpack.c.l.b16 %v162
    %v250 = vunpack.c.h.b16 %v162
    %v251 = vunpack.c.l.b16 %v163
    %v252 = vunpack.c.h.b16 %v163
    %v253 = vunpack.c.l.b16 %v164
    %v254 = vunpack.c.h.b16 %v164
    %v255 = vunpack.c.l.b16 %v165
    %v256 = vunpack.c.h.b16 %v165
    %v257 = vpack.c.b16 %v227, %v217
    %v258 = vpack.c.b16 %v228, %v218
    %v259 = vpack.c.b16 %v229, %v219
    %v260 = vpack.c.b16 %v230, %v220
    %v261 = vpack.c.b16 %v231, %v221
    %v262 = vpack.c.b16 %v232, %v222
    %v263 = vpack.c.b16 %v233, %v223
    %v264 = vpack.c.b16 %v234, %v224
    %v265 = vpack.c.b16 %v235, %v225
    %v266 = vpack.c.b16 %v236, %v226
    %v267 = vpack.c.b16 %v247, %v237
    %v268 = vpack.c.b16 %v248, %v238
    %v269 = vpack.c.b16 %v249, %v239
    %v270 = vpack.c.b16 %v250, %v240
    %v271 = vpack.c.b16 %v251, %v241
    %v272 = vpack.c.b16 %v252, %v242
    %v273 = vpack.c.b16 %v253, %v243
    %v274 = vpack.c.b16 %v254, %v244
    %v275 = vpack.c.b16 %v255, %v245
    %v276 = vpack.c.b16 %v256, %v246
    %vm297 = vcmask 261120
    %v299 = vsel %vm297, %v196, 0
    %301 = vmatpush.bf16.msra.mxu0 0
    %302 = vmatpush.bf16.msra.mxu0 0
    %303 = vmatpush.bf16.msra.mxu0 0
    %304 = vmatpush.bf16.msra.mxu0 0
    %305 = vmatpush.bf16.msra.mxu0 0
    %306 = vmatpush.bf16.msra.mxu0 0
    %307 = vmatpush.bf16.msra.mxu0 %v267
    %308 = vmatpush.bf16.msra.mxu0 %v257
    %309 = vmatmul.bf16.gmra.mxu0 %v299
    %v310 = vpop.f32.mrf.mxu0
    %v311 = vadd.f32 %v172, %v310
    %v312 = vpop.f32.mrf.mxu0
    %v313 = vadd.f32 %v172, %v312
    %314 = vdwg.mxu0
    %315 = vmatpush.bf16.msra.mxu0 0
    %316 = vmatpush.bf16.msra.mxu0 0
    %317 = vmatpush.bf16.msra.mxu0 0
    %318 = vmatpush.bf16.msra.mxu0 0
    %319 = vmatpush.bf16.msra.mxu0 0
    %320 = vmatpush.bf16.msra.mxu0 0
    %321 = vmatpush.bf16.msra.mxu0 %v268
    %322 = vmatpush.bf16.msra.mxu0 %v258
    %323 = vmatmul.bf16.gmra.mxu0 %v299
    %v324 = vpop.f32.mrf.mxu0
    %v325 = vadd.f32 %v173, %v324
    %v326 = vpop.f32.mrf.mxu0
    %v327 = vadd.f32 %v173, %v326
    %328 = vdwg.mxu0
    %329 = vmatpush.bf16.msra.mxu0 0
    %330 = vmatpush.bf16.msra.mxu0 0
    %331 = vmatpush.bf16.msra.mxu0 0
    %332 = vmatpush.bf16.msra.mxu0 0
    %333 = vmatpush.bf16.msra.mxu0 0
    %334 = vmatpush.bf16.msra.mxu0 0
    %335 = vmatpush.bf16.msra.mxu0 %v269
    %336 = vmatpush.bf16.msra.mxu0 %v259
    %337 = vmatmul.bf16.gmra.mxu0 %v299
    %v338 = vpop.f32.mrf.mxu0
    %v339 = vadd.f32 %v174, %v338
    %v340 = vpop.f32.mrf.mxu0
    %v341 = vadd.f32 %v174, %v340
    %342 = vdwg.mxu0
    %343 = vmatpush.bf16.msra.mxu0 0
    %344 = vmatpush.bf16.msra.mxu0 0
    %345 = vmatpush.bf16.msra.mxu0 0
    %346 = vmatpush.bf16.msra.mxu0 0
    %347 = vmatpush.bf16.msra.mxu0 0
    %348 = vmatpush.bf16.msra.mxu0 0
    %349 = vmatpush.bf16.msra.mxu0 %v270
    %350 = vmatpush.bf16.msra.mxu0 %v260
    %351 = vmatmul.bf16.gmra.mxu0 %v299
    %v352 = vpop.f32.mrf.mxu0
    %v353 = vadd.f32 %v175, %v352
    %v354 = vpop.f32.mrf.mxu0
    %v355 = vadd.f32 %v175, %v354
    %356 = vdwg.mxu0
    %357 = vmatpush.bf16.msra.mxu0 0
    %358 = vmatpush.bf16.msra.mxu0 0
    %359 = vmatpush.bf16.msra.mxu0 0
    %360 = vmatpush.bf16.msra.mxu0 0
    %361 = vmatpush.bf16.msra.mxu0 0
    %362 = vmatpush.bf16.msra.mxu0 0
    %363 = vmatpush.bf16.msra.mxu0 %v271
    %364 = vmatpush.bf16.msra.mxu0 %v261
    %365 = vmatmul.bf16.gmra.mxu0 %v299
    %v366 = vpop.f32.mrf.mxu0
    %v367 = vadd.f32 %v176, %v366
    %v368 = vpop.f32.mrf.mxu0
    %v369 = vadd.f32 %v176, %v368
    %370 = vdwg.mxu0
    %371 = vmatpush.bf16.msra.mxu0 0
    %372 = vmatpush.bf16.msra.mxu0 0
    %373 = vmatpush.bf16.msra.mxu0 0
    %374 = vmatpush.bf16.msra.mxu0 0
    %375 = vmatpush.bf16.msra.mxu0 0
    %376 = vmatpush.bf16.msra.mxu0 0
    %377 = vmatpush.bf16.msra.mxu0 %v272
    %378 = vmatpush.bf16.msra.mxu0 %v262
    %379 = vmatmul.bf16.gmra.mxu0 %v299
    %v380 = vpop.f32.mrf.mxu0
    %v381 = vadd.f32 %v177, %v380
    %v382 = vpop.f32.mrf.mxu0
    %v383 = vadd.f32 %v177, %v382
    %384 = vdwg.mxu0
    %385 = vmatpush.bf16.msra.mxu0 0
    %386 = vmatpush.bf16.msra.mxu0 0
    %387 = vmatpush.bf16.msra.mxu0 0
    %388 = vmatpush.bf16.msra.mxu0 0
    %389 = vmatpush.bf16.msra.mxu0 0
    %390 = vmatpush.bf16.msra.mxu0 0
    %391 = vmatpush.bf16.msra.mxu0 %v273
    %392 = vmatpush.bf16.msra.mxu0 %v263
    %393 = vmatmul.bf16.gmra.mxu0 %v299
    %v394 = vpop.f32.mrf.mxu0
    %v395 = vadd.f32 %v178, %v394
    %v396 = vpop.f32.mrf.mxu0
    %v397 = vadd.f32 %v178, %v396
    %398 = vdwg.mxu0
    %399 = vmatpush.bf16.msra.mxu0 0
    %400 = vmatpush.bf16.msra.mxu0 0
    %401 = vmatpush.bf16.msra.mxu0 0
    %402 = vmatpush.bf16.msra.mxu0 0
    %403 = vmatpush.bf16.msra.mxu0 0
    %404 = vmatpush.bf16.msra.mxu0 0
    %405 = vmatpush.bf16.msra.mxu0 %v274
    %406 = vmatpush.bf16.msra.mxu0 %v264
    %407 = vmatmul.bf16.gmra.mxu0 %v299
    %v408 = vpop.f32.mrf.mxu0
    %v409 = vadd.f32 %v179, %v408
    %v410 = vpop.f32.mrf.mxu0
    %v411 = vadd.f32 %v179, %v410
    %412 = vdwg.mxu0
    %413 = vmatpush.bf16.msra.mxu0 0
    %414 = vmatpush.bf16.msra.mxu0 0
    %415 = vmatpush.bf16.msra.mxu0 0
    %416 = vmatpush.bf16.msra.mxu0 0
    %417 = vmatpush.bf16.msra.mxu0 0
    %418 = vmatpush.bf16.msra.mxu0 0
    %419 = vmatpush.bf16.msra.mxu0 %v275
    %420 = vmatpush.bf16.msra.mxu0 %v265
    %421 = vmatmul.bf16.gmra.mxu0 %v299
    %v422 = vpop.f32.mrf.mxu0
    %v423 = vadd.f32 %v180, %v422
    %v424 = vpop.f32.mrf.mxu0
    %v425 = vadd.f32 %v180, %v424
    %426 = vdwg.mxu0
    %427 = vmatpush.bf16.msra.mxu0 0
    %428 = vmatpush.bf16.msra.mxu0 0
    %429 = vmatpush.bf16.msra.mxu0 0
    %430 = vmatpush.bf16.msra.mxu0 0
    %431 = vmatpush.bf16.msra.mxu0 0
    %432 = vmatpush.bf16.msra.mxu0 0
    %433 = vmatpush.bf16.msra.mxu0 %v276
    %434 = vmatpush.bf16.msra.mxu0 %v266
    %435 = vmatmul.bf16.gmra.mxu0 %v299
    %v436 = vpop.f32.mrf.mxu0
    %v437 = vadd.f32 %v181, %v436
    %v438 = vpop.f32.mrf.mxu0
    %v439 = vadd.f32 %v181, %v438
    %440 = vdwg.mxu0
    %v441 = vld [vmem:[#allocation3] sm:$0xf]
    %v442 = vld [vmem:[#allocation3 + $0x4] sm:$0xf]
    %v443 = vld [vmem:[#allocation8] sm:$0xff]
    %v444 = vld [vmem:[#allocation8 + $0x8] sm:$0xff]
    %v445 = vld [vmem:[#allocation8 + $0x10] sm:$0xff]
    %v446 = vld [vmem:[#allocation8 + $0x18] sm:$0xff]
    %v447 = vld [vmem:[#allocation8 + $0x20] sm:$0xff]
    %v448 = vld [vmem:[#allocation8 + $0x28] sm:$0xff]
    %v449 = vld [vmem:[#allocation8 + $0x30] sm:$0xff]
    %v450 = vld [vmem:[#allocation8 + $0x38] sm:$0xff]
    %v451 = vld [vmem:[#allocation8 + $0x40] sm:$0xff]
    %v452 = vld [vmem:[#allocation8 + $0x48] sm:$0xff]
    %v453 = vld [vmem:[#allocation8 + $0x50] sm:$0xff]
    %v454 = vld [vmem:[#allocation8 + $0x58] sm:$0xff]
    %v455 = vld [vmem:[#allocation8 + $0x60] sm:$0xff]
    %v456 = vld [vmem:[#allocation8 + $0x68] sm:$0xff]
    %v457 = vld [vmem:[#allocation8 + $0x70] sm:$0xff]
    %v458 = vld [vmem:[#allocation8 + $0x78] sm:$0xff]
    %v459 = vld [vmem:[#allocation8 + $0x80] sm:$0xff]
    %v460 = vld [vmem:[#allocation8 + $0x88] sm:$0xff]
    %v461 = vld [vmem:[#allocation8 + $0x90] sm:$0xff]
    %v462 = vld [vmem:[#allocation8 + $0x98] sm:$0xff]
    %s463 = scalar_lea.vmem [#allocation9], %s166
    %v464 = vld [vmem:[%s463] sm:$0xff]
    %v465 = vld [vmem:[%s463 + $0x8] sm:$0x3]
    %v468 = vperm.slane %v464, 0
    %v469 = vperm.slane %v464, 1
    %v470 = vperm.slane %v464, 2
    %v471 = vperm.slane %v464, 3
    %v472 = vperm.slane %v464, 4
    %v473 = vperm.slane %v464, 5
    %v474 = vperm.slane %v464, 6
    %v475 = vperm.slane %v464, 7
    %v476 = vperm.slane %v465, 0
    %v477 = vperm.slane %v465, 1
    %v490 = vunpack.c.l.b16 %v441
    %v491 = vunpack.c.l.b16 %v442
    %v492 = vpack.c.b16 %v491, %v490
    %v513 = vunpack.c.l.b16 %v443
    %v514 = vunpack.c.h.b16 %v443
    %v515 = vunpack.c.l.b16 %v444
    %v516 = vunpack.c.h.b16 %v444
    %v517 = vunpack.c.l.b16 %v445
    %v518 = vunpack.c.h.b16 %v445
    %v519 = vunpack.c.l.b16 %v446
    %v520 = vunpack.c.h.b16 %v446
    %v521 = vunpack.c.l.b16 %v447
    %v522 = vunpack.c.h.b16 %v447
    %v523 = vunpack.c.l.b16 %v448
    %v524 = vunpack.c.h.b16 %v448
    %v525 = vunpack.c.l.b16 %v449
    %v526 = vunpack.c.h.b16 %v449
    %v527 = vunpack.c.l.b16 %v450
    %v528 = vunpack.c.h.b16 %v450
    %v529 = vunpack.c.l.b16 %v451
    %v530 = vunpack.c.h.b16 %v451
    %v531 = vunpack.c.l.b16 %v452
    %v532 = vunpack.c.h.b16 %v452
    %v533 = vunpack.c.l.b16 %v453
    %v534 = vunpack.c.h.b16 %v453
    %v535 = vunpack.c.l.b16 %v454
    %v536 = vunpack.c.h.b16 %v454
    %v537 = vunpack.c.l.b16 %v455
    %v538 = vunpack.c.h.b16 %v455
    %v539 = vunpack.c.l.b16 %v456
    %v540 = vunpack.c.h.b16 %v456
    %v541 = vunpack.c.l.b16 %v457
    %v542 = vunpack.c.h.b16 %v457
    %v543 = vunpack.c.l.b16 %v458
    %v544 = vunpack.c.h.b16 %v458
    %v545 = vunpack.c.l.b16 %v459
    %v546 = vunpack.c.h.b16 %v459
    %v547 = vunpack.c.l.b16 %v460
    %v548 = vunpack.c.h.b16 %v460
    %v549 = vunpack.c.l.b16 %v461
    %v550 = vunpack.c.h.b16 %v461
    %v551 = vunpack.c.l.b16 %v462
    %v552 = vunpack.c.h.b16 %v462
    %v553 = vpack.c.b16 %v523, %v513
    %v554 = vpack.c.b16 %v524, %v514
    %v555 = vpack.c.b16 %v525, %v515
    %v556 = vpack.c.b16 %v526, %v516
    %v557 = vpack.c.b16 %v527, %v517
    %v558 = vpack.c.b16 %v528, %v518
    %v559 = vpack.c.b16 %v529, %v519
    %v560 = vpack.c.b16 %v530, %v520
    %v561 = vpack.c.b16 %v531, %v521
    %v562 = vpack.c.b16 %v532, %v522
    %v563 = vpack.c.b16 %v543, %v533
    %v564 = vpack.c.b16 %v544, %v534
    %v565 = vpack.c.b16 %v545, %v535
    %v566 = vpack.c.b16 %v546, %v536
    %v567 = vpack.c.b16 %v547, %v537
    %v568 = vpack.c.b16 %v548, %v538
    %v569 = vpack.c.b16 %v549, %v539
    %v570 = vpack.c.b16 %v550, %v540
    %v571 = vpack.c.b16 %v551, %v541
    %v572 = vpack.c.b16 %v552, %v542
    %v594 = vsel %vm297, %v492, 0
    %596 = vmatpush.bf16.msra.mxu0 0
    %597 = vmatpush.bf16.msra.mxu0 0
    %598 = vmatpush.bf16.msra.mxu0 0
    %599 = vmatpush.bf16.msra.mxu0 0
    %600 = vmatpush.bf16.msra.mxu0 0
    %601 = vmatpush.bf16.msra.mxu0 0
    %602 = vmatpush.bf16.msra.mxu0 %v563
    %603 = vmatpush.bf16.msra.mxu0 %v553
    %604 = vmatmul.bf16.gmra.mxu0 %v594
    %v605 = vpop.f32.mrf.mxu0
    %v606 = vadd.f32 %v468, %v605
    %v607 = vpop.f32.mrf.mxu0
    %v608 = vadd.f32 %v468, %v607
    %609 = vdwg.mxu0
    %610 = vmatpush.bf16.msra.mxu0 0
    %611 = vmatpush.bf16.msra.mxu0 0
    %612 = vmatpush.bf16.msra.mxu0 0
    %613 = vmatpush.bf16.msra.mxu0 0
    %614 = vmatpush.bf16.msra.mxu0 0
    %615 = vmatpush.bf16.msra.mxu0 0
    %616 = vmatpush.bf16.msra.mxu0 %v564
    %617 = vmatpush.bf16.msra.mxu0 %v554
    %618 = vmatmul.bf16.gmra.mxu0 %v594
    %v619 = vpop.f32.mrf.mxu0
    %v620 = vadd.f32 %v469, %v619
    %v621 = vpop.f32.mrf.mxu0
    %v622 = vadd.f32 %v469, %v621
    %623 = vdwg.mxu0
    %624 = vmatpush.bf16.msra.mxu0 0
    %625 = vmatpush.bf16.msra.mxu0 0
    %626 = vmatpush.bf16.msra.mxu0 0
    %627 = vmatpush.bf16.msra.mxu0 0
    %628 = vmatpush.bf16.msra.mxu0 0
    %629 = vmatpush.bf16.msra.mxu0 0
    %630 = vmatpush.bf16.msra.mxu0 %v565
    %631 = vmatpush.bf16.msra.mxu0 %v555
    %632 = vmatmul.bf16.gmra.mxu0 %v594
    %v633 = vpop.f32.mrf.mxu0
    %v634 = vadd.f32 %v470, %v633
    %v635 = vpop.f32.mrf.mxu0
    %v636 = vadd.f32 %v470, %v635
    %637 = vdwg.mxu0
    %638 = vmatpush.bf16.msra.mxu0 0
    %639 = vmatpush.bf16.msra.mxu0 0
    %640 = vmatpush.bf16.msra.mxu0 0
    %641 = vmatpush.bf16.msra.mxu0 0
    %642 = vmatpush.bf16.msra.mxu0 0
    %643 = vmatpush.bf16.msra.mxu0 0
    %644 = vmatpush.bf16.msra.mxu0 %v566
    %645 = vmatpush.bf16.msra.mxu0 %v556
    %646 = vmatmul.bf16.gmra.mxu0 %v594
    %v647 = vpop.f32.mrf.mxu0
    %v648 = vadd.f32 %v471, %v647
    %v649 = vpop.f32.mrf.mxu0
    %v650 = vadd.f32 %v471, %v649
    %651 = vdwg.mxu0
    %652 = vmatpush.bf16.msra.mxu0 0
    %653 = vmatpush.bf16.msra.mxu0 0
    %654 = vmatpush.bf16.msra.mxu0 0
    %655 = vmatpush.bf16.msra.mxu0 0
    %656 = vmatpush.bf16.msra.mxu0 0
    %657 = vmatpush.bf16.msra.mxu0 0
    %658 = vmatpush.bf16.msra.mxu0 %v567
    %659 = vmatpush.bf16.msra.mxu0 %v557
    %660 = vmatmul.bf16.gmra.mxu0 %v594
    %v661 = vpop.f32.mrf.mxu0
    %v662 = vadd.f32 %v472, %v661
    %v663 = vpop.f32.mrf.mxu0
    %v664 = vadd.f32 %v472, %v663
    %665 = vdwg.mxu0
    %666 = vmatpush.bf16.msra.mxu0 0
    %667 = vmatpush.bf16.msra.mxu0 0
    %668 = vmatpush.bf16.msra.mxu0 0
    %669 = vmatpush.bf16.msra.mxu0 0
    %670 = vmatpush.bf16.msra.mxu0 0
    %671 = vmatpush.bf16.msra.mxu0 0
    %672 = vmatpush.bf16.msra.mxu0 %v568
    %673 = vmatpush.bf16.msra.mxu0 %v558
    %674 = vmatmul.bf16.gmra.mxu0 %v594
    %v675 = vpop.f32.mrf.mxu0
    %v676 = vadd.f32 %v473, %v675
    %v677 = vpop.f32.mrf.mxu0
    %v678 = vadd.f32 %v473, %v677
    %679 = vdwg.mxu0
    %680 = vmatpush.bf16.msra.mxu0 0
    %681 = vmatpush.bf16.msra.mxu0 0
    %682 = vmatpush.bf16.msra.mxu0 0
    %683 = vmatpush.bf16.msra.mxu0 0
    %684 = vmatpush.bf16.msra.mxu0 0
    %685 = vmatpush.bf16.msra.mxu0 0
    %686 = vmatpush.bf16.msra.mxu0 %v569
    %687 = vmatpush.bf16.msra.mxu0 %v559
    %688 = vmatmul.bf16.gmra.mxu0 %v594
    %v689 = vpop.f32.mrf.mxu0
    %v690 = vadd.f32 %v474, %v689
    %v691 = vpop.f32.mrf.mxu0
    %v692 = vadd.f32 %v474, %v691
    %693 = vdwg.mxu0
    %694 = vmatpush.bf16.msra.mxu0 0
    %695 = vmatpush.bf16.msra.mxu0 0
    %696 = vmatpush.bf16.msra.mxu0 0
    %697 = vmatpush.bf16.msra.mxu0 0
    %698 = vmatpush.bf16.msra.mxu0 0
    %699 = vmatpush.bf16.msra.mxu0 0
    %700 = vmatpush.bf16.msra.mxu0 %v570
    %701 = vmatpush.bf16.msra.mxu0 %v560
    %702 = vmatmul.bf16.gmra.mxu0 %v594
    %v703 = vpop.f32.mrf.mxu0
    %v704 = vadd.f32 %v475, %v703
    %v705 = vpop.f32.mrf.mxu0
    %v706 = vadd.f32 %v475, %v705
    %707 = vdwg.mxu0
    %708 = vmatpush.bf16.msra.mxu0 0
    %709 = vmatpush.bf16.msra.mxu0 0
    %710 = vmatpush.bf16.msra.mxu0 0
    %711 = vmatpush.bf16.msra.mxu0 0
    %712 = vmatpush.bf16.msra.mxu0 0
    %713 = vmatpush.bf16.msra.mxu0 0
    %714 = vmatpush.bf16.msra.mxu0 %v571
    %715 = vmatpush.bf16.msra.mxu0 %v561
    %716 = vmatmul.bf16.gmra.mxu0 %v594
    %v717 = vpop.f32.mrf.mxu0
    %v718 = vadd.f32 %v476, %v717
    %v719 = vpop.f32.mrf.mxu0
    %v720 = vadd.f32 %v476, %v719
    %721 = vdwg.mxu0
    %722 = vmatpush.bf16.msra.mxu0 0
    %723 = vmatpush.bf16.msra.mxu0 0
    %724 = vmatpush.bf16.msra.mxu0 0
    %725 = vmatpush.bf16.msra.mxu0 0
    %726 = vmatpush.bf16.msra.mxu0 0
    %727 = vmatpush.bf16.msra.mxu0 0
    %728 = vmatpush.bf16.msra.mxu0 %v572
    %729 = vmatpush.bf16.msra.mxu0 %v562
    %730 = vmatmul.bf16.gmra.mxu0 %v594
    %v731 = vpop.f32.mrf.mxu0
    %v732 = vadd.f32 %v477, %v731
    %v733 = vpop.f32.mrf.mxu0
    %v734 = vadd.f32 %v477, %v733
    %735 = vdwg.mxu0
    %v736 = vmul.f32 %v311, %v606
    %v737 = vmul.f32 %v325, %v620
    %v738 = vmul.f32 %v339, %v634
    %v739 = vmul.f32 %v353, %v648
    %v740 = vmul.f32 %v367, %v662
    %v741 = vmul.f32 %v381, %v676
    %v742 = vmul.f32 %v395, %v690
    %v743 = vmul.f32 %v409, %v704
    %v744 = vmul.f32 %v423, %v718
    %v745 = vmul.f32 %v437, %v732
    %v746 = vmul.f32 %v313, %v608
    %v747 = vmul.f32 %v327, %v622
    %v748 = vmul.f32 %v341, %v636
    %v749 = vmul.f32 %v355, %v650
    %v750 = vmul.f32 %v369, %v664
    %v751 = vmul.f32 %v383, %v678
    %v752 = vmul.f32 %v397, %v692
    %v753 = vmul.f32 %v411, %v706
    %v754 = vmul.f32 %v425, %v720
    %v755 = vmul.f32 %v439, %v734
    %v756 = vmul.f32 %v737, %v736
    %v757 = vmul.f32 %v747, %v746
    %v758 = vadd.f32 %v736, 0.0
    %v759 = vadd.f32 %v746, 0.0
    %v760 = vadd.f32 %v756, 0.0
    %v761 = vadd.f32 %v757, 0.0
    %v762 = vmul.f32 %v739, %v738
    %v763 = vmul.f32 %v749, %v748
    %v764 = vadd.f32 %v758, %v738
    %v765 = vadd.f32 %v759, %v748
    %v766 = vadd.f32 %v760, %v762
    %v767 = vadd.f32 %v761, %v763
    %v768 = vmul.f32 %v741, %v740
    %v769 = vmul.f32 %v751, %v750
    %v770 = vadd.f32 %v764, %v740
    %v771 = vadd.f32 %v765, %v750
    %v772 = vadd.f32 %v766, %v768
    %v773 = vadd.f32 %v767, %v769
    %v774 = vmul.f32 %v743, %v742
    %v775 = vmul.f32 %v753, %v752
    %v776 = vadd.f32 %v770, %v742
    %v777 = vadd.f32 %v771, %v752
    %v778 = vadd.f32 %v772, %v774
    %v779 = vadd.f32 %v773, %v775
    %v780 = vmul.f32 %v745, %v744
    %v781 = vmul.f32 %v755, %v754
    %v782 = vadd.f32 %v776, %v744
    %v783 = vadd.f32 %v777, %v754
    %v784 = vadd.f32 %v778, %v780
    %v785 = vadd.f32 %v779, %v781
    %v786 = vld [vmem:[#allocation2] sm:$0xff]
    %v787 = vld [vmem:[#allocation2 + $0x8] sm:$0xff]
    %v788 = vld [vmem:[#allocation2 + $0x10] sm:$0xff]
    %v789 = vld [vmem:[#allocation2 + $0x18] sm:$0xff]
    %v790 = vadd.f32 %v786, %v782
    %v791 = vadd.f32 %v787, %v784
    %v792 = vadd.f32 %v788, %v783
    %v793 = vadd.f32 %v789, %v785
    %794 = vst [vmem:[#allocation2] sm:$0xff] %v790
    %795 = vst [vmem:[#allocation2 + $0x8] sm:$0xff] %v791
    %796 = vst [vmem:[#allocation2 + $0x10] sm:$0xff] %v792
    %797 = vst [vmem:[#allocation2 + $0x18] sm:$0xff] %v793
    // Predicated region
    $region66: #{tpu_custom_call.1} parent=1 // pred_check
      %p798 = pneg %p136
    $region67: #{tpu_custom_call.1} parent=1 // pred_check_branch
      %800 = sbr.rel (%p798) target = $region69
    $region68: #{tpu_custom_call.1} parent=1 // pred_region
      %v801 = vld [vmem:[#allocation2] sm:$0xff]
      %v802 = vld [vmem:[#allocation2 + $0x8] sm:$0xff]
      %v803 = vld [vmem:[#allocation2 + $0x10] sm:$0xff]
      %v804 = vld [vmem:[#allocation2 + $0x18] sm:$0xff]
      %v805 = vand.u32 2147483647, %v801
      %v806 = vand.u32 2147483647, %v803
      %v807 = vrsqrt.pop %v805
      %v808 = vmul.f32 %v807, %v805
      %v809 = vmul.f32 %v808, %v807
      %v810 = vmul.f32 0.5, %v809
      %v811 = vsub.f32 1.5, %v810
      %v812 = vmul.f32 %v807, %v811
      %v813 = vmul.f32 %v805, %v812
      %vm814 = vcmp.eq.f32.partialorder %v805, inf
      %v815 = vsel %vm814, %v805, %v813
      %vm816 = vcmp.eq.f32.partialorder %v805, 0.0
      %v817 = vand.u32 %v805, 2147483648
      %v818 = vsel %vm816, %v817, %v815
      %v819 = vrsqrt.pop %v806
      %v820 = vmul.f32 %v819, %v806
      %v821 = vmul.f32 %v820, %v819
      %v822 = vmul.f32 0.5, %v821
      %v823 = vsub.f32 1.5, %v822
      %v824 = vmul.f32 %v819, %v823
      %v825 = vmul.f32 %v806, %v824
      %vm826 = vcmp.eq.f32.partialorder %v806, inf
      %v827 = vsel %vm826, %v806, %v825
      %vm828 = vcmp.eq.f32.partialorder %v806, 0.0
      %v829 = vand.u32 %v806, 2147483648
      %v830 = vsel %vm828, %v829, %v827
      %vm831 = vcmp.lt.f32.partialorder %v801, 0.0
      %vm832 = vcmp.lt.f32.partialorder %v803, 0.0
      %v833 = vsub.f32 0.0, %v818
      %v834 = vsub.f32 0.0, %v830
      %v835 = vsel %vm831, %v833, %v818
      %v836 = vsel %vm832, %v834, %v830
      %v837 = vmul.f32 %v835, %v835
      %v838 = vmul.f32 %v836, %v836
      %839 = vadd.xlane.f32.xlu0 %v837
      %v840 = vpop.xlane.xlu0 %839
      %841 = vadd.xlane.f32.xlu0 %v838
      %v842 = vpop.xlane.xlu0 %841
      %v843 = vmax.f32 %v840, 1e-24
      %v844 = vmax.f32 %v842, 1e-24
      %v845 = vrsqrt.pop %v843
      %v846 = vmul.f32 %v845, %v843
      %v847 = vmul.f32 %v846, %v845
      %v848 = vmul.f32 0.5, %v847
      %v849 = vsub.f32 1.5, %v848
      %v850 = vmul.f32 %v845, %v849
      %vm851 = vweird.f32 %v843
      %vm852 = vweird.f32 %v845
      %vm853 = vmor %vm851, %vm852
      %v854 = vsel %vm853, %v845, %v850
      %v855 = vrsqrt.pop %v844
      %v856 = vmul.f32 %v855, %v844
      %v857 = vmul.f32 %v856, %v855
      %v858 = vmul.f32 0.5, %v857
      %v859 = vsub.f32 1.5, %v858
      %v860 = vmul.f32 %v855, %v859
      %vm861 = vweird.f32 %v844
      %vm862 = vweird.f32 %v855
      %vm863 = vmor %vm861, %vm862
      %v864 = vsel %vm863, %v855, %v860
      %v865 = vmul.f32 %v835, %v854
      %v866 = vmul.f32 %v836, %v864
      %v867 = vand.u32 2147483647, %v802
      %v868 = vand.u32 2147483647, %v804
      %v869 = vrsqrt.pop %v867
      %v870 = vmul.f32 %v869, %v867
      %v871 = vmul.f32 %v870, %v869
      %v872 = vmul.f32 0.5, %v871
      %v873 = vsub.f32 1.5, %v872
      %v874 = vmul.f32 %v869, %v873
      %v875 = vmul.f32 %v867, %v874
      %vm876 = vcmp.eq.f32.partialorder %v867, inf
      %v877 = vsel %vm876, %v867, %v875
      %vm878 = vcmp.eq.f32.partialorder %v867, 0.0
      %v879 = vand.u32 %v867, 2147483648
      %v880 = vsel %vm878, %v879, %v877
      %v881 = vrsqrt.pop %v868
      %v882 = vmul.f32 %v881, %v868
      %v883 = vmul.f32 %v882, %v881
      %v884 = vmul.f32 0.5, %v883
      %v885 = vsub.f32 1.5, %v884
      %v886 = vmul.f32 %v881, %v885
      %v887 = vmul.f32 %v868, %v886
      %vm888 = vcmp.eq.f32.partialorder %v868, inf
      %v889 = vsel %vm888, %v868, %v887
      %vm890 = vcmp.eq.f32.partialorder %v868, 0.0
      %v891 = vand.u32 %v868, 2147483648
      %v892 = vsel %vm890, %v891, %v889
      %vm893 = vcmp.lt.f32.partialorder %v802, 0.0
      %vm894 = vcmp.lt.f32.partialorder %v804, 0.0
      %v895 = vsub.f32 0.0, %v880
      %v896 = vsub.f32 0.0, %v892
      %v897 = vsel %vm893, %v895, %v880
      %v898 = vsel %vm894, %v896, %v892
      %v899 = vmul.f32 %v897, %v897
      %v900 = vmul.f32 %v898, %v898
      %901 = vadd.xlane.f32.xlu0 %v899
      %v902 = vpop.xlane.xlu0 %901
      %903 = vadd.xlane.f32.xlu0 %v900
      %v904 = vpop.xlane.xlu0 %903
      %v905 = vmax.f32 %v902, 1e-24
      %v906 = vmax.f32 %v904, 1e-24
      %v907 = vrsqrt.pop %v905
      %v908 = vmul.f32 %v907, %v905
      %v909 = vmul.f32 %v908, %v907
      %v910 = vmul.f32 0.5, %v909
      %v911 = vsub.f32 1.5, %v910
      %v912 = vmul.f32 %v907, %v911
      %vm913 = vweird.f32 %v905
      %vm914 = vweird.f32 %v907
      %vm915 = vmor %vm913, %vm914
      %v916 = vsel %vm915, %v907, %v912
      %v917 = vrsqrt.pop %v906
      %v918 = vmul.f32 %v917, %v906
      %v919 = vmul.f32 %v918, %v917
      %v920 = vmul.f32 0.5, %v919
      %v921 = vsub.f32 1.5, %v920
      %v922 = vmul.f32 %v917, %v921
      %vm923 = vweird.f32 %v906
      %vm924 = vweird.f32 %v917
      %vm925 = vmor %vm923, %vm924
      %v926 = vsel %vm925, %v917, %v922
      %v927 = vmul.f32 %v897, %v916
      %v928 = vmul.f32 %v898, %v926
      %v929 = vpack.c.bf16 %v866, %v865
      %v930 = vpack.c.bf16 %v928, %v927
      %v931 = vld [vmem:[#allocation14] sm:$0xf]
      %v932 = vld [vmem:[#allocation14 + $0x4] sm:$0xf]
      %v933 = vld [vmem:[#allocation14 + $0x8] sm:$0xf]
      %v934 = vld [vmem:[#allocation14 + $0xc] sm:$0xf]
      %v935 = vld [vmem:[#allocation14 + $0x10] sm:$0xf]
      %v936 = vld [vmem:[#allocation14 + $0x14] sm:$0xf]
      %v937 = vld [vmem:[#allocation14 + $0x18] sm:$0xf]
      %v938 = vld [vmem:[#allocation14 + $0x1c] sm:$0xf]
      %v939 = vld [vmem:[#allocation14 + $0x20] sm:$0xf]
      %v940 = vld [vmem:[#allocation14 + $0x24] sm:$0xf]
      %v941 = vld [vmem:[#allocation14 + $0x28] sm:$0xf]
      %v942 = vld [vmem:[#allocation14 + $0x2c] sm:$0xf]
      %v943 = vld [vmem:[#allocation14 + $0x30] sm:$0xf]
      %v944 = vld [vmem:[#allocation14 + $0x34] sm:$0xf]
      %v945 = vld [vmem:[#allocation14 + $0x38] sm:$0xf]
      %v946 = vld [vmem:[#allocation14 + $0x3c] sm:$0xf]
      %v947 = vld [vmem:[#allocation14 + $0x40] sm:$0xf]
      %v948 = vld [vmem:[#allocation14 + $0x44] sm:$0xf]
      %v949 = vld [vmem:[#allocation14 + $0x48] sm:$0xf]
      %v950 = vld [vmem:[#allocation14 + $0x4c] sm:$0xf]
      %v951 = vld [vmem:[#allocation14 + $0x50] sm:$0xf]
      %v952 = vld [vmem:[#allocation14 + $0x54] sm:$0xf]
      %v953 = vld [vmem:[#allocation14 + $0x58] sm:$0xf]
      %v954 = vld [vmem:[#allocation14 + $0x5c] sm:$0xf]
      %v955 = vld [vmem:[#allocation14 + $0x60] sm:$0xf]
      %v956 = vld [vmem:[#allocation14 + $0x64] sm:$0xf]
      %v957 = vld [vmem:[#allocation14 + $0x68] sm:$0xf]
      %v958 = vld [vmem:[#allocation14 + $0x6c] sm:$0xf]
      %v959 = vld [vmem:[#allocation14 + $0x70] sm:$0xf]
      %v960 = vld [vmem:[#allocation14 + $0x74] sm:$0xf]
      %v961 = vld [vmem:[#allocation14 + $0x78] sm:$0xf]
      %v962 = vld [vmem:[#allocation14 + $0x7c] sm:$0xf]
      %v963 = vld [vmem:[%s7] sm:$0x1]
      %v965 = vperm.slane %v963, 0
      %v999 = vunpack.c.l.b16 %v931
      %v1000 = vunpack.c.l.b16 %v932
      %v1001 = vunpack.c.l.b16 %v933
      %v1002 = vunpack.c.l.b16 %v934
      %v1003 = vunpack.c.l.b16 %v935
      %v1004 = vunpack.c.l.b16 %v936
      %v1005 = vunpack.c.l.b16 %v937
      %v1006 = vunpack.c.l.b16 %v938
      %v1007 = vunpack.c.l.b16 %v939
      %v1008 = vunpack.c.l.b16 %v940
      %v1009 = vunpack.c.l.b16 %v941
      %v1010 = vunpack.c.l.b16 %v942
      %v1011 = vunpack.c.l.b16 %v943
      %v1012 = vunpack.c.l.b16 %v944
      %v1013 = vunpack.c.l.b16 %v945
      %v1014 = vunpack.c.l.b16 %v946
      %v1015 = vunpack.c.l.b16 %v947
      %v1016 = vunpack.c.l.b16 %v948
      %v1017 = vunpack.c.l.b16 %v949
      %v1018 = vunpack.c.l.b16 %v950
      %v1019 = vunpack.c.l.b16 %v951
      %v1020 = vunpack.c.l.b16 %v952
      %v1021 = vunpack.c.l.b16 %v953
      %v1022 = vunpack.c.l.b16 %v954
      %v1023 = vunpack.c.l.b16 %v955
      %v1024 = vunpack.c.l.b16 %v956
      %v1025 = vunpack.c.l.b16 %v957
      %v1026 = vunpack.c.l.b16 %v958
      %v1027 = vunpack.c.l.b16 %v959
      %v1028 = vunpack.c.l.b16 %v960
      %v1029 = vunpack.c.l.b16 %v961
      %v1030 = vunpack.c.l.b16 %v962
      %v1031 = vpack.c.b16 %v1000, %v999
      %v1032 = vpack.c.b16 %v1002, %v1001
      %v1033 = vpack.c.b16 %v1004, %v1003
      %v1034 = vpack.c.b16 %v1006, %v1005
      %v1035 = vpack.c.b16 %v1008, %v1007
      %v1036 = vpack.c.b16 %v1010, %v1009
      %v1037 = vpack.c.b16 %v1012, %v1011
      %v1038 = vpack.c.b16 %v1014, %v1013
      %v1039 = vpack.c.b16 %v1016, %v1015
      %v1040 = vpack.c.b16 %v1018, %v1017
      %v1041 = vpack.c.b16 %v1020, %v1019
      %v1042 = vpack.c.b16 %v1022, %v1021
      %v1043 = vpack.c.b16 %v1024, %v1023
      %v1044 = vpack.c.b16 %v1026, %v1025
      %v1045 = vpack.c.b16 %v1028, %v1027
      %v1046 = vpack.c.b16 %v1030, %v1029
      %1063 = vmatpush.bf16.msra.mxu0 %v1038
      %1064 = vmatpush.bf16.msra.mxu0 %v1037
      %1065 = vmatpush.bf16.msra.mxu0 %v1036
      %1066 = vmatpush.bf16.msra.mxu0 %v1035
      %1067 = vmatpush.bf16.msra.mxu0 %v1034
      %1068 = vmatpush.bf16.msra.mxu0 %v1033
      %1069 = vmatpush.bf16.msra.mxu0 %v1032
      %1070 = vmatpush.bf16.msra.mxu0 %v1031
      %1071 = vmatmul.bf16.gmra.mxu0 %v929
      %v1072 = vpop.f32.mrf.mxu0
      %v1073 = vadd.f32 %v965, %v1072
      %v1074 = vpop.f32.mrf.mxu0
      %v1075 = vadd.f32 %v965, %v1074
      %1076 = vdwg.mxu0
      %1077 = vmatpush.bf16.msra.mxu0 %v1046
      %1078 = vmatpush.bf16.msra.mxu0 %v1045
      %1079 = vmatpush.bf16.msra.mxu0 %v1044
      %1080 = vmatpush.bf16.msra.mxu0 %v1043
      %1081 = vmatpush.bf16.msra.mxu0 %v1042
      %1082 = vmatpush.bf16.msra.mxu0 %v1041
      %1083 = vmatpush.bf16.msra.mxu0 %v1040
      %1084 = vmatpush.bf16.msra.mxu0 %v1039
      %1085 = vmatmul.bf16.gmra.mxu0 %v930
      %v1086 = vpop.f32.mrf.mxu0
      %v1087 = vadd.f32 %v1073, %v1086
      %v1088 = vpop.f32.mrf.mxu0
      %v1089 = vadd.f32 %v1075, %v1088
      %1090 = vdwg.mxu0
      %1091 = vst [vmem:[#allocation15] sm:$0xff] %v1087
      %1092 = vst [vmem:[#allocation15 + $0x8] sm:$0xff] %v1089
    $region69: #{tpu_custom_call.1} parent=1 // pred_fallthru
      _
    // Predicated region
    $region70: #{tpu_custom_call.1} parent=1 // pred_check
      _
    $region71: #{tpu_custom_call.1} parent=1 // pred_check_branch
      %1094 = sbr.rel (0) target = $region73
    $region72: #{tpu_custom_call.1} parent=1 // pred_region
      %1096 = vsyncadd [#allocation5], 0
      %s1097 = sshll.u32 [#allocation15], 4
      %s1098 = int_to_ptr.vmem [resolvable:$true] %s1097
      %s1099 = sshll.u32 %s8, 4
      %s1100 = int_to_ptr.hbm [resolvable:$true] %s1099
      %1105 = dma.vmem_to_hbm [thread:$0]  %s1098, 256, %s1100, [#allocation5], 128, 128, 8
    $region73: #{tpu_custom_call.1} parent=1 // pred_fallthru
      _
    // Predicated region
    $region74: #{tpu_custom_call.1} parent=1 // pred_check
      _
    $region75: #{tpu_custom_call.1} parent=1 // pred_check_branch
      %1107 = sbr.rel (0) target = $region77
    $region76: #{tpu_custom_call.1} parent=1 // pred_region
      %1109 = dma.done [#allocation5], 256
    $region77: #{tpu_custom_call.1} parent=1 // pred_fallthru
      _
    %1110 = vsyncpa [#allocation4], 1
    %1111 = vsyncpa [#allocation7], 1
    %1112 = vsyncpa [#allocation10], 1
    %1113 = vsyncpa [#allocation13], 1
    %1114 = vsyncpa [#allocation5], 1

</llo_original>
